<compile_context>
chip_gen: v7x
topology: tpu7x:2x2x1
jax: 0.10.0
libtpu: 0.0.40
codegen_flags: <defaults>
</compile_context>

<pallas_src>
import jax
import jax.numpy as jnp
from jax.experimental import pallas as pl
from jax.experimental.pallas import tpu as pltpu

KH = KW = 7
STRIDE = 4
PAD = 1
C_OUT = 4
NUM_CLASSES = 10


def _round_up(x, m):
    return ((x + m - 1) // m) * m


def _net_kernel(patch_ref, wbd_ref, wfc_ref, out_ref):
    # patch_ref: [TILE_N, KP_pad]      bf16  im2col patches, columns (p, k), zero-padded
    # wbd_ref:   [KP_pad, H_pad]       bf16  block-diagonal conv weight, zero-padded
    # wfc_ref:   [H_pad,  OUT_pad]     bf16  FC weight (rows in (p, c) order), zero-padded
    # out_ref:   [TILE_N, OUT_pad]     f32
    h = jnp.dot(patch_ref[...], wbd_ref[...], preferred_element_type=jnp.float32)
    h = jnp.maximum(h, 0.0)  # ReLU in f32 (v5e VPU has no bf16)
    out_ref[...] = jnp.dot(h.astype(wfc_ref.dtype), wfc_ref[...],
                           preferred_element_type=jnp.float32)


def _pick_tile_n(n_pad):
    # n_pad is always a multiple of 8; use the whole batch when small.
    if n_pad <= 256:
        return n_pad
    for t in (256, 128, 64, 32, 16, 8):
        if n_pad % t == 0:
            return t
    return n_pad


@jax.jit
def net_forward(x, w_conv, w_fc):
    """x: [N, 1, H, W] f32 (NCHW), w_conv: [4, 1, 7, 7], w_fc: [10, 144]."""
    N, c_in, H, W = x.shape
    assert c_in == 1
    OH = (H + 2 * PAD - KH) // STRIDE + 1
    OW = (W + 2 * PAD - KW) // STRIDE + 1
    P = OH * OW
    K = KH * KW
    assert C_OUT * P == w_fc.shape[1]

    KP = P * K                      # 1764 for 28x28 input
    HD = P * C_OUT                  # 144
    KP_pad = _round_up(KP, 128)     # 1792
    H_pad = _round_up(HD, 128)      # 256
    OUT_pad = _round_up(NUM_CLASSES, 128)  # 128 -> lane-dense store
    N_pad = max(8, _round_up(N, 8))

    # ---- glue (plain JAX): im2col via static strided slices, weight reshuffling ----
    xp = jnp.pad(x[:, 0], ((0, 0), (PAD, PAD), (PAD, PAD)))          # [N, H+2, W+2]
    cols = []
    for kh in range(KH):
        for kw in range(KW):
            cols.append(xp[:, kh:kh + (OH - 1) * STRIDE + 1:STRIDE,
                            kw:kw + (OW - 1) * STRIDE + 1:STRIDE])   # [N, OH, OW]
    patches = jnp.stack(cols, axis=-1)                               # [N, OH, OW, K]
    patches = patches.reshape(N, KP).astype(jnp.bfloat16)            # col = p*K + k
    patches = jnp.pad(patches, ((0, N_pad - N), (0, KP_pad - KP)))   # aligned

    wc_t = w_conv.reshape(C_OUT, K).T.astype(jnp.float32)            # [K, C]
    # Block-diagonal conv weight: W_bd[p*K+k, q*C+c] = wc_t[k, c] * (p == q)
    w_bd = jnp.kron(jnp.eye(P, dtype=jnp.float32), wc_t)             # [P*K, P*C]
    w_bd = jnp.pad(w_bd, ((0, KP_pad - KP), (0, H_pad - HD))).astype(jnp.bfloat16)

    # Torch flatten order of the conv output is column c*P + p; regroup the FC weight
    # so its rows follow the kernel's (p, c) order: wfc_perm[p*C+c, j] = w_fc[j, c*P+p]
    wfc_perm = (w_fc.reshape(NUM_CLASSES, C_OUT, P)
                .transpose(2, 1, 0)
                .reshape(HD, NUM_CLASSES))                            # [P*C, 10]
    wfc_perm = jnp.pad(wfc_perm,
                       ((0, H_pad - HD), (0, OUT_pad - NUM_CLASSES))
                       ).astype(jnp.bfloat16)                         # [H_pad, 128]

    # ---- hot path: one Pallas kernel, one grid step per batch tile ----
    tile_n = _pick_tile_n(N_pad)
    assert N_pad % tile_n == 0
    grid = (N_pad // tile_n,)

    out = pl.pallas_call(
        _net_kernel,
        out_shape=jax.ShapeDtypeStruct((N_pad, OUT_pad), jnp.float32),
        grid_spec=pltpu.PrefetchScalarGridSpec(
            num_scalar_prefetch=0,
            grid=grid,
            in_specs=[
                pl.BlockSpec((tile_n, KP_pad), lambda i: (i, 0)),     # patches
                pl.BlockSpec((KP_pad, H_pad), lambda i: (0, 0)),      # conv weight
                pl.BlockSpec((H_pad, OUT_pad), lambda i: (0, 0)),     # fc weight
            ],
            out_specs=pl.BlockSpec((tile_n, OUT_pad), lambda i: (i, 0)),
        ),
        compiler_params=pltpu.CompilerParams(
            dimension_semantics=("parallel",)),
    )(patches, w_bd, wfc_perm)

    return out[:N, :NUM_CLASSES]


if __name__ == "__main__":
    key = jax.random.PRNGKey(0)
    k1, k2, k3 = jax.random.split(key, 3)

    # Input implied by the module: 1x28x28 so that flatten size = 4*6*6 = 144.
    N, H, W = 2, 28, 28
    x = jax.random.normal(k1, (N, 1, H, W), dtype=jnp.float32)
    w_conv = jax.random.normal(k2, (C_OUT, 1, KH, KW), dtype=jnp.float32) * 0.1
    w_fc = jax.random.normal(k3, (NUM_CLASSES, C_OUT * 6 * 6), dtype=jnp.float32) * 0.1
    # NOTE: Net.normalize_weights divides conv weights by 1.0 -> no-op, nothing to do.

    out = net_forward(x, w_conv, w_fc)
    jax.block_until_ready(out)

    # Pure-JAX f32 reference to validate semantics.
    conv = jax.lax.conv_general_dilated(
        x, w_conv, window_strides=(STRIDE, STRIDE),
        padding=((PAD, PAD), (PAD, PAD)),
        dimension_numbers=("NCHW", "OIHW", "NCHW"))
    ref = jnp.maximum(conv, 0.0).reshape(N, -1) @ w_fc.T
    assert out.shape == (N, NUM_CLASSES)
    # Kernel feeds the MXU bf16 operands (f32 accumulation), so allow bf16-level error.
    err = float(jnp.max(jnp.abs(out - ref)))
    assert jnp.allclose(out, ref, rtol=5e-2, atol=8e-2), err

    print("KERNEL_OK")
</pallas_src>

<mosaic_0001>
module attributes {stable_mosaic.version = 11 : i64} {
  func.func @_net_kernel(%arg0: i32, %arg1: memref<8x1792xbf16, #tpu.memory_space<vmem>>, %arg2: memref<1792x256xbf16, #tpu.memory_space<vmem>>, %arg3: memref<256x128xbf16, #tpu.memory_space<vmem>>, %arg4: memref<8x128xf32, #tpu.memory_space<vmem>>) attributes {dimension_semantics = [#tpu.dimension_semantics<parallel>], iteration_bounds = array<i64: 1>, scalar_prefetch = 0 : i64, scratch_operands = 0 : i64, tpu.core_type = #tpu.core_type<tc>, window_params = [{transform_indices = @transform_0, window_bounds = array<i64: 8, 1792>}, {pipeline_mode = #tpu.pipeline_mode<synchronous>, transform_indices = @transform_1, window_bounds = array<i64: 1792, 256>}, {pipeline_mode = #tpu.pipeline_mode<synchronous>, transform_indices = @transform_2, window_bounds = array<i64: 256, 128>}, {transform_indices = @transform_3, window_bounds = array<i64: 8, 128>}]} {
    %c0 = arith.constant 0 : index
    %c0_0 = arith.constant 0 : index
    %0 = vector.load %arg1[%c0, %c0_0] : memref<8x1792xbf16, #tpu.memory_space<vmem>>, vector<8x1792xbf16>
    %c0_1 = arith.constant 0 : index
    %c0_2 = arith.constant 0 : index
    %1 = vector.load %arg2[%c0_1, %c0_2] : memref<1792x256xbf16, #tpu.memory_space<vmem>>, vector<1792x256xbf16>
    %cst = arith.constant dense<0.000000e+00> : vector<8x256xf32>
    %2 = tpu.matmul %0, %1, %cst {dimension_numbers = #tpu.dot_dimension_numbers<[1], [0], [0], [1], [0, 0, 1, 1], [], []>} : vector<8x1792xbf16>, vector<1792x256xbf16>, vector<8x256xf32> -> vector<8x256xf32>
    %cst_3 = arith.constant 0.000000e+00 : f32
    %3 = vector.broadcast %cst_3 : f32 to vector<8x256xf32>
    %4 = arith.maximumf %2, %3 : vector<8x256xf32>
    %5 = arith.truncf %4 : vector<8x256xf32> to vector<8x256xbf16>
    %c0_4 = arith.constant 0 : index
    %c0_5 = arith.constant 0 : index
    %6 = vector.load %arg3[%c0_4, %c0_5] : memref<256x128xbf16, #tpu.memory_space<vmem>>, vector<256x128xbf16>
    %cst_6 = arith.constant dense<0.000000e+00> : vector<8x128xf32>
    %7 = tpu.matmul %5, %6, %cst_6 {dimension_numbers = #tpu.dot_dimension_numbers<[1], [0], [0], [1], [0, 0, 1, 1], [], []>} : vector<8x256xbf16>, vector<256x128xbf16>, vector<8x128xf32> -> vector<8x128xf32>
    %c0_7 = arith.constant 0 : index
    %c0_8 = arith.constant 0 : index
    %8 = vector.load %arg4[%c0_7, %c0_8] : memref<8x128xf32, #tpu.memory_space<vmem>>, vector<8x128xf32>
    tpu.vector_store %arg4[%c0_7, %c0_8], %7 {strides = array<i32>} : memref<8x128xf32, #tpu.memory_space<vmem>>, vector<8x128xf32>,
    return
  }
  func.func @transform_0(%arg0: i32) -> (i32, i32) {
    %c0_i32 = arith.constant 0 : i32
    %c0_i32_0 = arith.constant 0 : i32
    return %arg0, %c0_i32 : i32, i32
  }
  func.func @transform_1(%arg0: i32) -> (i32, i32) {
    %c0_i32 = arith.constant 0 : i32
    %c0_i32_0 = arith.constant 0 : i32
    %c0_i32_1 = arith.constant 0 : i32
    return %c0_i32, %c0_i32_0 : i32, i32
  }
  func.func @transform_2(%arg0: i32) -> (i32, i32) {
    %c0_i32 = arith.constant 0 : i32
    %c0_i32_0 = arith.constant 0 : i32
    %c0_i32_1 = arith.constant 0 : i32
    return %c0_i32, %c0_i32_0 : i32, i32
  }
  func.func @transform_3(%arg0: i32) -> (i32, i32) {
    %c0_i32 = arith.constant 0 : i32
    %c0_i32_0 = arith.constant 0 : i32
    return %arg0, %c0_i32 : i32, i32
  }
}

</mosaic_0001>

<llo_original>
// kernel: net_forward.1
$region0: #{net_forward.1}
  #allocation0 [shape = 'u32[]', space=smem, size = 0x4, offset = 0x4, fixed_abs, tag = 'smem constant byte address 0x4 - core index']
  #allocation1 [shape = 'u32[144,128]{1,0:T(1,128)}', space=vmem, size = 0x12000, scoped, tag = 'internal scratch']
  %s0 = inlined_call_operand.vmem [shape: bf16[8,1792], index: 0, kind: input, shape index: {}]
  %s1 = inlined_call_operand.vmem [shape: bf16[1792,256], index: 1, kind: input, shape index: {}]
  %s2 = inlined_call_operand.vmem [shape: bf16[256,128], index: 2, kind: input, shape index: {}]
  %s3 = inlined_call_operand.vmem [shape: f32[8,128], index: 3, kind: output, shape index: {}]
  %s4 = sld [smem:[#allocation0]]
  $region22: #{net_forward.1} parent=0
    _
  %s6 = ssub.s32 1, %s4
  %s7 = scalar_select 0, %s6, %s4
  // Predicated region
  $region2: #{net_forward.1} parent=0 // pred_check
    _
  $region3: #{net_forward.1} parent=0 // pred_check_branch
    %9 = sbr.rel (0) target = $region5
  $region4: #{net_forward.1} parent=0 // pred_region
    _
  $region5: #{net_forward.1} parent=0 // pred_fallthru
    _
  // Predicated region
  $region6: #{net_forward.1} parent=0 // pred_check
    _
  $region7: #{net_forward.1} parent=0 // pred_check_branch
    %11 = sbr.rel (0) target = $region9
  $region8: #{net_forward.1} parent=0 // pred_region
    _
  $region9: #{net_forward.1} parent=0 // pred_fallthru
    _
  // Predicated region
  $region10: #{net_forward.1} parent=0 // pred_check
    _
  $region11: #{net_forward.1} parent=0 // pred_check_branch
    %13 = sbr.rel (0) target = $region13
  $region12: #{net_forward.1} parent=0 // pred_region
    _
  $region13: #{net_forward.1} parent=0 // pred_fallthru
    _
  %v15 = vld [vmem:[%s0] sm:$0xff]
  %v16 = vld [vmem:[%s0 + $0x8] sm:$0xff]
  %v17 = vld [vmem:[%s0 + $0x10] sm:$0xff]
  %v18 = vld [vmem:[%s0 + $0x18] sm:$0xff]
  %v19 = vld [vmem:[%s0 + $0x20] sm:$0xff]
  %v20 = vld [vmem:[%s0 + $0x28] sm:$0xff]
  %v21 = vld [vmem:[%s0 + $0x30] sm:$0xff]
  %v22 = vld [vmem:[%s1] sm:$0xff]
  %v23 = vld [vmem:[%s1 + $0x8] sm:$0xff]
  %v24 = vld [vmem:[%s1 + $0x10] sm:$0xff]
  %v25 = vld [vmem:[%s1 + $0x18] sm:$0xff]
  %v26 = vld [vmem:[%s1 + $0x20] sm:$0xff]
  %v27 = vld [vmem:[%s1 + $0x28] sm:$0xff]
  %v28 = vld [vmem:[%s1 + $0x30] sm:$0xff]
  %v29 = vld [vmem:[%s1 + $0x38] sm:$0xff]
  %v30 = vld [vmem:[%s1 + $0x40] sm:$0xff]
  %v31 = vld [vmem:[%s1 + $0x48] sm:$0xff]
  %v32 = vld [vmem:[%s1 + $0x50] sm:$0xff]
  %v33 = vld [vmem:[%s1 + $0x58] sm:$0xff]
  %v34 = vld [vmem:[%s1 + $0x60] sm:$0xff]
  %v35 = vld [vmem:[%s1 + $0x68] sm:$0xff]
  %v36 = vld [vmem:[%s1 + $0x70] sm:$0xff]
  %v37 = vld [vmem:[%s1 + $0x78] sm:$0xff]
  %v38 = vld [vmem:[%s1 + $0x80] sm:$0xff]
  %v39 = vld [vmem:[%s1 + $0x88] sm:$0xff]
  %v40 = vld [vmem:[%s1 + $0x90] sm:$0xff]
  %v41 = vld [vmem:[%s1 + $0x98] sm:$0xff]
  %v42 = vld [vmem:[%s1 + $0xa0] sm:$0xff]
  %v43 = vld [vmem:[%s1 + $0xa8] sm:$0xff]
  %v44 = vld [vmem:[%s1 + $0xb0] sm:$0xff]
  %v45 = vld [vmem:[%s1 + $0xb8] sm:$0xff]
  %v46 = vld [vmem:[%s1 + $0xc0] sm:$0xff]
  %v47 = vld [vmem:[%s1 + $0xc8] sm:$0xff]
  %v48 = vld [vmem:[%s1 + $0xd0] sm:$0xff]
  %v49 = vld [vmem:[%s1 + $0xd8] sm:$0xff]
  %v50 = vld [vmem:[%s1 + $0xe0] sm:$0xff]
  %v51 = vld [vmem:[%s1 + $0xe8] sm:$0xff]
  %v52 = vld [vmem:[%s1 + $0xf0] sm:$0xff]
  %v53 = vld [vmem:[%s1 + $0xf8] sm:$0xff]
  %v54 = vld [vmem:[%s1 + $0x100] sm:$0xff]
  %v55 = vld [vmem:[%s1 + $0x108] sm:$0xff]
  %v56 = vld [vmem:[%s1 + $0x110] sm:$0xff]
  %v57 = vld [vmem:[%s1 + $0x118] sm:$0xff]
  %v58 = vld [vmem:[%s1 + $0x120] sm:$0xff]
  %v59 = vld [vmem:[%s1 + $0x128] sm:$0xff]
  %v60 = vld [vmem:[%s1 + $0x130] sm:$0xff]
  %v61 = vld [vmem:[%s1 + $0x138] sm:$0xff]
  %v62 = vld [vmem:[%s1 + $0x140] sm:$0xff]
  %v63 = vld [vmem:[%s1 + $0x148] sm:$0xff]
  %v64 = vld [vmem:[%s1 + $0x150] sm:$0xff]
  %v65 = vld [vmem:[%s1 + $0x158] sm:$0xff]
  %v66 = vld [vmem:[%s1 + $0x160] sm:$0xff]
  %v67 = vld [vmem:[%s1 + $0x168] sm:$0xff]
  %v68 = vld [vmem:[%s1 + $0x170] sm:$0xff]
  %v69 = vld [vmem:[%s1 + $0x178] sm:$0xff]
  %v70 = vld [vmem:[%s1 + $0x180] sm:$0xff]
  %v71 = vld [vmem:[%s1 + $0x188] sm:$0xff]
  %v72 = vld [vmem:[%s1 + $0x190] sm:$0xff]
  %v73 = vld [vmem:[%s1 + $0x198] sm:$0xff]
  %v74 = vld [vmem:[%s1 + $0x1a0] sm:$0xff]
  %v75 = vld [vmem:[%s1 + $0x1a8] sm:$0xff]
  %v76 = vld [vmem:[%s1 + $0x1b0] sm:$0xff]
  %v77 = vld [vmem:[%s1 + $0x1b8] sm:$0xff]
  %v78 = vld [vmem:[%s1 + $0x1c0] sm:$0xff]
  %v79 = vld [vmem:[%s1 + $0x1c8] sm:$0xff]
  %v80 = vld [vmem:[%s1 + $0x1d0] sm:$0xff]
  %v81 = vld [vmem:[%s1 + $0x1d8] sm:$0xff]
  %v82 = vld [vmem:[%s1 + $0x1e0] sm:$0xff]
  %v83 = vld [vmem:[%s1 + $0x1e8] sm:$0xff]
  %v84 = vld [vmem:[%s1 + $0x1f0] sm:$0xff]
  %v85 = vld [vmem:[%s1 + $0x1f8] sm:$0xff]
  %v86 = vld [vmem:[%s1 + $0x200] sm:$0xff]
  %v87 = vld [vmem:[%s1 + $0x208] sm:$0xff]
  %v88 = vld [vmem:[%s1 + $0x210] sm:$0xff]
  %v89 = vld [vmem:[%s1 + $0x218] sm:$0xff]
  %v90 = vld [vmem:[%s1 + $0x220] sm:$0xff]
  %v91 = vld [vmem:[%s1 + $0x228] sm:$0xff]
  %v92 = vld [vmem:[%s1 + $0x230] sm:$0xff]
  %v93 = vld [vmem:[%s1 + $0x238] sm:$0xff]
  %v94 = vld [vmem:[%s1 + $0x240] sm:$0xff]
  %v95 = vld [vmem:[%s1 + $0x248] sm:$0xff]
  %v96 = vld [vmem:[%s1 + $0x250] sm:$0xff]
  %v97 = vld [vmem:[%s1 + $0x258] sm:$0xff]
  %v98 = vld [vmem:[%s1 + $0x260] sm:$0xff]
  %v99 = vld [vmem:[%s1 + $0x268] sm:$0xff]
  %v100 = vld [vmem:[%s1 + $0x270] sm:$0xff]
  %v101 = vld [vmem:[%s1 + $0x278] sm:$0xff]
  %v102 = vld [vmem:[%s1 + $0x280] sm:$0xff]
  %v103 = vld [vmem:[%s1 + $0x288] sm:$0xff]
  %v104 = vld [vmem:[%s1 + $0x290] sm:$0xff]
  %v105 = vld [vmem:[%s1 + $0x298] sm:$0xff]
  %v106 = vld [vmem:[%s1 + $0x2a0] sm:$0xff]
  %v107 = vld [vmem:[%s1 + $0x2a8] sm:$0xff]
  %v108 = vld [vmem:[%s1 + $0x2b0] sm:$0xff]
  %v109 = vld [vmem:[%s1 + $0x2b8] sm:$0xff]
  %v110 = vld [vmem:[%s1 + $0x2c0] sm:$0xff]
  %v111 = vld [vmem:[%s1 + $0x2c8] sm:$0xff]
  %v112 = vld [vmem:[%s1 + $0x2d0] sm:$0xff]
  %v113 = vld [vmem:[%s1 + $0x2d8] sm:$0xff]
  %v114 = vld [vmem:[%s1 + $0x2e0] sm:$0xff]
  %v115 = vld [vmem:[%s1 + $0x2e8] sm:$0xff]
  %v116 = vld [vmem:[%s1 + $0x2f0] sm:$0xff]
  %v117 = vld [vmem:[%s1 + $0x2f8] sm:$0xff]
  %v118 = vld [vmem:[%s1 + $0x300] sm:$0xff]
  %v119 = vld [vmem:[%s1 + $0x308] sm:$0xff]
  %v120 = vld [vmem:[%s1 + $0x310] sm:$0xff]
  %v121 = vld [vmem:[%s1 + $0x318] sm:$0xff]
  %v122 = vld [vmem:[%s1 + $0x320] sm:$0xff]
  %v123 = vld [vmem:[%s1 + $0x328] sm:$0xff]
  %v124 = vld [vmem:[%s1 + $0x330] sm:$0xff]
  %v125 = vld [vmem:[%s1 + $0x338] sm:$0xff]
  %v126 = vld [vmem:[%s1 + $0x340] sm:$0xff]
  %v127 = vld [vmem:[%s1 + $0x348] sm:$0xff]
  %v128 = vld [vmem:[%s1 + $0x350] sm:$0xff]
  %v129 = vld [vmem:[%s1 + $0x358] sm:$0xff]
  %v130 = vld [vmem:[%s1 + $0x360] sm:$0xff]
  %v131 = vld [vmem:[%s1 + $0x368] sm:$0xff]
  %v132 = vld [vmem:[%s1 + $0x370] sm:$0xff]
  %v133 = vld [vmem:[%s1 + $0x378] sm:$0xff]
  %v134 = vld [vmem:[%s1 + $0x380] sm:$0xff]
  %v135 = vld [vmem:[%s1 + $0x388] sm:$0xff]
  %v136 = vld [vmem:[%s1 + $0x390] sm:$0xff]
  %v137 = vld [vmem:[%s1 + $0x398] sm:$0xff]
  %v138 = vld [vmem:[%s1 + $0x3a0] sm:$0xff]
  %v139 = vld [vmem:[%s1 + $0x3a8] sm:$0xff]
  %v140 = vld [vmem:[%s1 + $0x3b0] sm:$0xff]
  %v141 = vld [vmem:[%s1 + $0x3b8] sm:$0xff]
  %v142 = vld [vmem:[%s1 + $0x3c0] sm:$0xff]
  %v143 = vld [vmem:[%s1 + $0x3c8] sm:$0xff]
  %v144 = vld [vmem:[%s1 + $0x3d0] sm:$0xff]
  %v145 = vld [vmem:[%s1 + $0x3d8] sm:$0xff]
  %v146 = vld [vmem:[%s1 + $0x3e0] sm:$0xff]
  %v147 = vld [vmem:[%s1 + $0x3e8] sm:$0xff]
  %v148 = vld [vmem:[%s1 + $0x3f0] sm:$0xff]
  %v149 = vld [vmem:[%s1 + $0x3f8] sm:$0xff]
  %v150 = vld [vmem:[%s1 + $0x400] sm:$0xff]
  %v151 = vld [vmem:[%s1 + $0x408] sm:$0xff]
  %v152 = vld [vmem:[%s1 + $0x410] sm:$0xff]
  %v153 = vld [vmem:[%s1 + $0x418] sm:$0xff]
  %v154 = vld [vmem:[%s1 + $0x420] sm:$0xff]
  %v155 = vld [vmem:[%s1 + $0x428] sm:$0xff]
  %v156 = vld [vmem:[%s1 + $0x430] sm:$0xff]
  %v157 = vld [vmem:[%s1 + $0x438] sm:$0xff]
  %v158 = vld [vmem:[%s1 + $0x440] sm:$0xff]
  %v159 = vld [vmem:[%s1 + $0x448] sm:$0xff]
  %v160 = vld [vmem:[%s1 + $0x450] sm:$0xff]
  %v161 = vld [vmem:[%s1 + $0x458] sm:$0xff]
  %v162 = vld [vmem:[%s1 + $0x460] sm:$0xff]
  %v163 = vld [vmem:[%s1 + $0x468] sm:$0xff]
  %v164 = vld [vmem:[%s1 + $0x470] sm:$0xff]
  %v165 = vld [vmem:[%s1 + $0x478] sm:$0xff]
  %v166 = vld [vmem:[%s1 + $0x480] sm:$0xff]
  %v167 = vld [vmem:[%s1 + $0x488] sm:$0xff]
  %v168 = vld [vmem:[%s1 + $0x490] sm:$0xff]
  %v169 = vld [vmem:[%s1 + $0x498] sm:$0xff]
  %v170 = vld [vmem:[%s1 + $0x4a0] sm:$0xff]
  %v171 = vld [vmem:[%s1 + $0x4a8] sm:$0xff]
  %v172 = vld [vmem:[%s1 + $0x4b0] sm:$0xff]
  %v173 = vld [vmem:[%s1 + $0x4b8] sm:$0xff]
  %v174 = vld [vmem:[%s1 + $0x4c0] sm:$0xff]
  %v175 = vld [vmem:[%s1 + $0x4c8] sm:$0xff]
  %v176 = vld [vmem:[%s1 + $0x4d0] sm:$0xff]
  %v177 = vld [vmem:[%s1 + $0x4d8] sm:$0xff]
  %v178 = vld [vmem:[%s1 + $0x4e0] sm:$0xff]
  %v179 = vld [vmem:[%s1 + $0x4e8] sm:$0xff]
  %v180 = vld [vmem:[%s1 + $0x4f0] sm:$0xff]
  %v181 = vld [vmem:[%s1 + $0x4f8] sm:$0xff]
  %v182 = vld [vmem:[%s1 + $0x500] sm:$0xff]
  %v183 = vld [vmem:[%s1 + $0x508] sm:$0xff]
  %v184 = vld [vmem:[%s1 + $0x510] sm:$0xff]
  %v185 = vld [vmem:[%s1 + $0x518] sm:$0xff]
  %v186 = vld [vmem:[%s1 + $0x520] sm:$0xff]
  %v187 = vld [vmem:[%s1 + $0x528] sm:$0xff]
  %v188 = vld [vmem:[%s1 + $0x530] sm:$0xff]
  %v189 = vld [vmem:[%s1 + $0x538] sm:$0xff]
  %v190 = vld [vmem:[%s1 + $0x540] sm:$0xff]
  %v191 = vld [vmem:[%s1 + $0x548] sm:$0xff]
  %v192 = vld [vmem:[%s1 + $0x550] sm:$0xff]
  %v193 = vld [vmem:[%s1 + $0x558] sm:$0xff]
  %v194 = vld [vmem:[%s1 + $0x560] sm:$0xff]
  %v195 = vld [vmem:[%s1 + $0x568] sm:$0xff]
  %v196 = vld [vmem:[%s1 + $0x570] sm:$0xff]
  %v197 = vld [vmem:[%s1 + $0x578] sm:$0xff]
  %v198 = vld [vmem:[%s1 + $0x580] sm:$0xff]
  %v199 = vld [vmem:[%s1 + $0x588] sm:$0xff]
  %v200 = vld [vmem:[%s1 + $0x590] sm:$0xff]
  %v201 = vld [vmem:[%s1 + $0x598] sm:$0xff]
  %v202 = vld [vmem:[%s1 + $0x5a0] sm:$0xff]
  %v203 = vld [vmem:[%s1 + $0x5a8] sm:$0xff]
  %v204 = vld [vmem:[%s1 + $0x5b0] sm:$0xff]
  %v205 = vld [vmem:[%s1 + $0x5b8] sm:$0xff]
  %v206 = vld [vmem:[%s1 + $0x5c0] sm:$0xff]
  %v207 = vld [vmem:[%s1 + $0x5c8] sm:$0xff]
  %v208 = vld [vmem:[%s1 + $0x5d0] sm:$0xff]
  %v209 = vld [vmem:[%s1 + $0x5d8] sm:$0xff]
  %v210 = vld [vmem:[%s1 + $0x5e0] sm:$0xff]
  %v211 = vld [vmem:[%s1 + $0x5e8] sm:$0xff]
  %v212 = vld [vmem:[%s1 + $0x5f0] sm:$0xff]
  %v213 = vld [vmem:[%s1 + $0x5f8] sm:$0xff]
  %v214 = vld [vmem:[%s1 + $0x600] sm:$0xff]
  %v215 = vld [vmem:[%s1 + $0x608] sm:$0xff]
  %v216 = vld [vmem:[%s1 + $0x610] sm:$0xff]
  %v217 = vld [vmem:[%s1 + $0x618] sm:$0xff]
  %v218 = vld [vmem:[%s1 + $0x620] sm:$0xff]
  %v219 = vld [vmem:[%s1 + $0x628] sm:$0xff]
  %v220 = vld [vmem:[%s1 + $0x630] sm:$0xff]
  %v221 = vld [vmem:[%s1 + $0x638] sm:$0xff]
  %v222 = vld [vmem:[%s1 + $0x640] sm:$0xff]
  %v223 = vld [vmem:[%s1 + $0x648] sm:$0xff]
  %v224 = vld [vmem:[%s1 + $0x650] sm:$0xff]
  %v225 = vld [vmem:[%s1 + $0x658] sm:$0xff]
  %v226 = vld [vmem:[%s1 + $0x660] sm:$0xff]
  %v227 = vld [vmem:[%s1 + $0x668] sm:$0xff]
  %v228 = vld [vmem:[%s1 + $0x670] sm:$0xff]
  %v229 = vld [vmem:[%s1 + $0x678] sm:$0xff]
  %v230 = vld [vmem:[%s1 + $0x680] sm:$0xff]
  %v231 = vld [vmem:[%s1 + $0x688] sm:$0xff]
  %v232 = vld [vmem:[%s1 + $0x690] sm:$0xff]
  %v233 = vld [vmem:[%s1 + $0x698] sm:$0xff]
  %v234 = vld [vmem:[%s1 + $0x6a0] sm:$0xff]
  %v235 = vld [vmem:[%s1 + $0x6a8] sm:$0xff]
  %v236 = vld [vmem:[%s1 + $0x6b0] sm:$0xff]
  %v237 = vld [vmem:[%s1 + $0x6b8] sm:$0xff]
  %v238 = vld [vmem:[%s1 + $0x6c0] sm:$0xff]
  %v239 = vld [vmem:[%s1 + $0x6c8] sm:$0xff]
  %v240 = vld [vmem:[%s1 + $0x6d0] sm:$0xff]
  %v241 = vld [vmem:[%s1 + $0x6d8] sm:$0xff]
  %v242 = vld [vmem:[%s1 + $0x6e0] sm:$0xff]
  %v243 = vld [vmem:[%s1 + $0x6e8] sm:$0xff]
  %v244 = vld [vmem:[%s1 + $0x6f0] sm:$0xff]
  %v245 = vld [vmem:[%s1 + $0x6f8] sm:$0xff]
  %v253 = vunpack.c.l.b16 %v15
  %v254 = vunpack.c.h.b16 %v15
  %v255 = vunpack.c.l.b16 %v16
  %v256 = vunpack.c.h.b16 %v16
  %v257 = vunpack.c.l.b16 %v17
  %v258 = vunpack.c.h.b16 %v17
  %v259 = vunpack.c.l.b16 %v18
  %v260 = vunpack.c.h.b16 %v18
  %v261 = vunpack.c.l.b16 %v19
  %v262 = vunpack.c.h.b16 %v19
  %v263 = vunpack.c.l.b16 %v20
  %v264 = vunpack.c.h.b16 %v20
  %v265 = vunpack.c.l.b16 %v21
  %v266 = vunpack.c.h.b16 %v21
  %v267 = vpack.c.b16 %v253, %v253
  %v268 = vpack.c.b16 %v254, %v254
  %v269 = vpack.c.b16 %v255, %v255
  %v270 = vpack.c.b16 %v256, %v256
  %v271 = vpack.c.b16 %v257, %v257
  %v272 = vpack.c.b16 %v258, %v258
  %v273 = vpack.c.b16 %v259, %v259
  %v274 = vpack.c.b16 %v260, %v260
  %v275 = vpack.c.b16 %v261, %v261
  %v276 = vpack.c.b16 %v262, %v262
  %v277 = vpack.c.b16 %v263, %v263
  %v278 = vpack.c.b16 %v264, %v264
  %v279 = vpack.c.b16 %v265, %v265
  %v280 = vpack.c.b16 %v266, %v266
  %v519 = vunpack.c.l.b16 %v22
  %v520 = vunpack.c.h.b16 %v22
  %v521 = vunpack.c.l.b16 %v23
  %v522 = vunpack.c.h.b16 %v23
  %v523 = vunpack.c.l.b16 %v24
  %v524 = vunpack.c.h.b16 %v24
  %v525 = vunpack.c.l.b16 %v25
  %v526 = vunpack.c.h.b16 %v25
  %v527 = vunpack.c.l.b16 %v26
  %v528 = vunpack.c.h.b16 %v26
  %v529 = vunpack.c.l.b16 %v27
  %v530 = vunpack.c.h.b16 %v27
  %v531 = vunpack.c.l.b16 %v28
  %v532 = vunpack.c.h.b16 %v28
  %v533 = vunpack.c.l.b16 %v29
  %v534 = vunpack.c.h.b16 %v29
  %v535 = vunpack.c.l.b16 %v30
  %v536 = vunpack.c.h.b16 %v30
  %v537 = vunpack.c.l.b16 %v31
  %v538 = vunpack.c.h.b16 %v31
  %v539 = vunpack.c.l.b16 %v32
  %v540 = vunpack.c.h.b16 %v32
  %v541 = vunpack.c.l.b16 %v33
  %v542 = vunpack.c.h.b16 %v33
  %v543 = vunpack.c.l.b16 %v34
  %v544 = vunpack.c.h.b16 %v34
  %v545 = vunpack.c.l.b16 %v35
  %v546 = vunpack.c.h.b16 %v35
  %v547 = vunpack.c.l.b16 %v36
  %v548 = vunpack.c.h.b16 %v36
  %v549 = vunpack.c.l.b16 %v37
  %v550 = vunpack.c.h.b16 %v37
  %v551 = vunpack.c.l.b16 %v38
  %v552 = vunpack.c.h.b16 %v38
  %v553 = vunpack.c.l.b16 %v39
  %v554 = vunpack.c.h.b16 %v39
  %v555 = vunpack.c.l.b16 %v40
  %v556 = vunpack.c.h.b16 %v40
  %v557 = vunpack.c.l.b16 %v41
  %v558 = vunpack.c.h.b16 %v41
  %v559 = vunpack.c.l.b16 %v42
  %v560 = vunpack.c.h.b16 %v42
  %v561 = vunpack.c.l.b16 %v43
  %v562 = vunpack.c.h.b16 %v43
  %v563 = vunpack.c.l.b16 %v44
  %v564 = vunpack.c.h.b16 %v44
  %v565 = vunpack.c.l.b16 %v45
  %v566 = vunpack.c.h.b16 %v45
  %v567 = vunpack.c.l.b16 %v46
  %v568 = vunpack.c.h.b16 %v46
  %v569 = vunpack.c.l.b16 %v47
  %v570 = vunpack.c.h.b16 %v47
  %v571 = vunpack.c.l.b16 %v48
  %v572 = vunpack.c.h.b16 %v48
  %v573 = vunpack.c.l.b16 %v49
  %v574 = vunpack.c.h.b16 %v49
  %v575 = vunpack.c.l.b16 %v50
  %v576 = vunpack.c.h.b16 %v50
  %v577 = vunpack.c.l.b16 %v51
  %v578 = vunpack.c.h.b16 %v51
  %v579 = vunpack.c.l.b16 %v52
  %v580 = vunpack.c.h.b16 %v52
  %v581 = vunpack.c.l.b16 %v53
  %v582 = vunpack.c.h.b16 %v53
  %v583 = vunpack.c.l.b16 %v54
  %v584 = vunpack.c.h.b16 %v54
  %v585 = vunpack.c.l.b16 %v55
  %v586 = vunpack.c.h.b16 %v55
  %v587 = vunpack.c.l.b16 %v56
  %v588 = vunpack.c.h.b16 %v56
  %v589 = vunpack.c.l.b16 %v57
  %v590 = vunpack.c.h.b16 %v57
  %v591 = vunpack.c.l.b16 %v58
  %v592 = vunpack.c.h.b16 %v58
  %v593 = vunpack.c.l.b16 %v59
  %v594 = vunpack.c.h.b16 %v59
  %v595 = vunpack.c.l.b16 %v60
  %v596 = vunpack.c.h.b16 %v60
  %v597 = vunpack.c.l.b16 %v61
  %v598 = vunpack.c.h.b16 %v61
  %v599 = vunpack.c.l.b16 %v62
  %v600 = vunpack.c.h.b16 %v62
  %v601 = vunpack.c.l.b16 %v63
  %v602 = vunpack.c.h.b16 %v63
  %v603 = vunpack.c.l.b16 %v64
  %v604 = vunpack.c.h.b16 %v64
  %v605 = vunpack.c.l.b16 %v65
  %v606 = vunpack.c.h.b16 %v65
  %v607 = vunpack.c.l.b16 %v66
  %v608 = vunpack.c.h.b16 %v66
  %v609 = vunpack.c.l.b16 %v67
  %v610 = vunpack.c.h.b16 %v67
  %v611 = vunpack.c.l.b16 %v68
  %v612 = vunpack.c.h.b16 %v68
  %v613 = vunpack.c.l.b16 %v69
  %v614 = vunpack.c.h.b16 %v69
  %v615 = vunpack.c.l.b16 %v70
  %v616 = vunpack.c.h.b16 %v70
  %v617 = vunpack.c.l.b16 %v71
  %v618 = vunpack.c.h.b16 %v71
  %v619 = vunpack.c.l.b16 %v72
  %v620 = vunpack.c.h.b16 %v72
  %v621 = vunpack.c.l.b16 %v73
  %v622 = vunpack.c.h.b16 %v73
  %v623 = vunpack.c.l.b16 %v74
  %v624 = vunpack.c.h.b16 %v74
  %v625 = vunpack.c.l.b16 %v75
  %v626 = vunpack.c.h.b16 %v75
  %v627 = vunpack.c.l.b16 %v76
  %v628 = vunpack.c.h.b16 %v76
  %v629 = vunpack.c.l.b16 %v77
  %v630 = vunpack.c.h.b16 %v77
  %v631 = vunpack.c.l.b16 %v78
  %v632 = vunpack.c.h.b16 %v78
  %v633 = vunpack.c.l.b16 %v79
  %v634 = vunpack.c.h.b16 %v79
  %v635 = vunpack.c.l.b16 %v80
  %v636 = vunpack.c.h.b16 %v80
  %v637 = vunpack.c.l.b16 %v81
  %v638 = vunpack.c.h.b16 %v81
  %v639 = vunpack.c.l.b16 %v82
  %v640 = vunpack.c.h.b16 %v82
  %v641 = vunpack.c.l.b16 %v83
  %v642 = vunpack.c.h.b16 %v83
  %v643 = vunpack.c.l.b16 %v84
  %v644 = vunpack.c.h.b16 %v84
  %v645 = vunpack.c.l.b16 %v85
  %v646 = vunpack.c.h.b16 %v85
  %v647 = vunpack.c.l.b16 %v86
  %v648 = vunpack.c.h.b16 %v86
  %v649 = vunpack.c.l.b16 %v87
  %v650 = vunpack.c.h.b16 %v87
  %v651 = vunpack.c.l.b16 %v88
  %v652 = vunpack.c.h.b16 %v88
  %v653 = vunpack.c.l.b16 %v89
  %v654 = vunpack.c.h.b16 %v89
  %v655 = vunpack.c.l.b16 %v90
  %v656 = vunpack.c.h.b16 %v90
  %v657 = vunpack.c.l.b16 %v91
  %v658 = vunpack.c.h.b16 %v91
  %v659 = vunpack.c.l.b16 %v92
  %v660 = vunpack.c.h.b16 %v92
  %v661 = vunpack.c.l.b16 %v93
  %v662 = vunpack.c.h.b16 %v93
  %v663 = vunpack.c.l.b16 %v94
  %v664 = vunpack.c.h.b16 %v94
  %v665 = vunpack.c.l.b16 %v95
  %v666 = vunpack.c.h.b16 %v95
  %v667 = vunpack.c.l.b16 %v96
  %v668 = vunpack.c.h.b16 %v96
  %v669 = vunpack.c.l.b16 %v97
  %v670 = vunpack.c.h.b16 %v97
  %v671 = vunpack.c.l.b16 %v98
  %v672 = vunpack.c.h.b16 %v98
  %v673 = vunpack.c.l.b16 %v99
  %v674 = vunpack.c.h.b16 %v99
  %v675 = vunpack.c.l.b16 %v100
  %v676 = vunpack.c.h.b16 %v100
  %v677 = vunpack.c.l.b16 %v101
  %v678 = vunpack.c.h.b16 %v101
  %v679 = vunpack.c.l.b16 %v102
  %v680 = vunpack.c.h.b16 %v102
  %v681 = vunpack.c.l.b16 %v103
  %v682 = vunpack.c.h.b16 %v103
  %v683 = vunpack.c.l.b16 %v104
  %v684 = vunpack.c.h.b16 %v104
  %v685 = vunpack.c.l.b16 %v105
  %v686 = vunpack.c.h.b16 %v105
  %v687 = vunpack.c.l.b16 %v106
  %v688 = vunpack.c.h.b16 %v106
  %v689 = vunpack.c.l.b16 %v107
  %v690 = vunpack.c.h.b16 %v107
  %v691 = vunpack.c.l.b16 %v108
  %v692 = vunpack.c.h.b16 %v108
  %v693 = vunpack.c.l.b16 %v109
  %v694 = vunpack.c.h.b16 %v109
  %v695 = vunpack.c.l.b16 %v110
  %v696 = vunpack.c.h.b16 %v110
  %v697 = vunpack.c.l.b16 %v111
  %v698 = vunpack.c.h.b16 %v111
  %v699 = vunpack.c.l.b16 %v112
  %v700 = vunpack.c.h.b16 %v112
  %v701 = vunpack.c.l.b16 %v113
  %v702 = vunpack.c.h.b16 %v113
  %v703 = vunpack.c.l.b16 %v114
  %v704 = vunpack.c.h.b16 %v114
  %v705 = vunpack.c.l.b16 %v115
  %v706 = vunpack.c.h.b16 %v115
  %v707 = vunpack.c.l.b16 %v116
  %v708 = vunpack.c.h.b16 %v116
  %v709 = vunpack.c.l.b16 %v117
  %v710 = vunpack.c.h.b16 %v117
  %v711 = vunpack.c.l.b16 %v118
  %v712 = vunpack.c.h.b16 %v118
  %v713 = vunpack.c.l.b16 %v119
  %v714 = vunpack.c.h.b16 %v119
  %v715 = vunpack.c.l.b16 %v120
  %v716 = vunpack.c.h.b16 %v120
  %v717 = vunpack.c.l.b16 %v121
  %v718 = vunpack.c.h.b16 %v121
  %v719 = vunpack.c.l.b16 %v122
  %v720 = vunpack.c.h.b16 %v122
  %v721 = vunpack.c.l.b16 %v123
  %v722 = vunpack.c.h.b16 %v123
  %v723 = vunpack.c.l.b16 %v124
  %v724 = vunpack.c.h.b16 %v124
  %v725 = vunpack.c.l.b16 %v125
  %v726 = vunpack.c.h.b16 %v125
  %v727 = vunpack.c.l.b16 %v126
  %v728 = vunpack.c.h.b16 %v126
  %v729 = vunpack.c.l.b16 %v127
  %v730 = vunpack.c.h.b16 %v127
  %v731 = vunpack.c.l.b16 %v128
  %v732 = vunpack.c.h.b16 %v128
  %v733 = vunpack.c.l.b16 %v129
  %v734 = vunpack.c.h.b16 %v129
  %v735 = vunpack.c.l.b16 %v130
  %v736 = vunpack.c.h.b16 %v130
  %v737 = vunpack.c.l.b16 %v131
  %v738 = vunpack.c.h.b16 %v131
  %v739 = vunpack.c.l.b16 %v132
  %v740 = vunpack.c.h.b16 %v132
  %v741 = vunpack.c.l.b16 %v133
  %v742 = vunpack.c.h.b16 %v133
  %v743 = vunpack.c.l.b16 %v134
  %v744 = vunpack.c.h.b16 %v134
  %v745 = vunpack.c.l.b16 %v135
  %v746 = vunpack.c.h.b16 %v135
  %v747 = vunpack.c.l.b16 %v136
  %v748 = vunpack.c.h.b16 %v136
  %v749 = vunpack.c.l.b16 %v137
  %v750 = vunpack.c.h.b16 %v137
  %v751 = vunpack.c.l.b16 %v138
  %v752 = vunpack.c.h.b16 %v138
  %v753 = vunpack.c.l.b16 %v139
  %v754 = vunpack.c.h.b16 %v139
  %v755 = vunpack.c.l.b16 %v140
  %v756 = vunpack.c.h.b16 %v140
  %v757 = vunpack.c.l.b16 %v141
  %v758 = vunpack.c.h.b16 %v141
  %v759 = vunpack.c.l.b16 %v142
  %v760 = vunpack.c.h.b16 %v142
  %v761 = vunpack.c.l.b16 %v143
  %v762 = vunpack.c.h.b16 %v143
  %v763 = vunpack.c.l.b16 %v144
  %v764 = vunpack.c.h.b16 %v144
  %v765 = vunpack.c.l.b16 %v145
  %v766 = vunpack.c.h.b16 %v145
  %v767 = vunpack.c.l.b16 %v146
  %v768 = vunpack.c.h.b16 %v146
  %v769 = vunpack.c.l.b16 %v147
  %v770 = vunpack.c.h.b16 %v147
  %v771 = vunpack.c.l.b16 %v148
  %v772 = vunpack.c.h.b16 %v148
  %v773 = vunpack.c.l.b16 %v149
  %v774 = vunpack.c.h.b16 %v149
  %v775 = vunpack.c.l.b16 %v150
  %v776 = vunpack.c.h.b16 %v150
  %v777 = vunpack.c.l.b16 %v151
  %v778 = vunpack.c.h.b16 %v151
  %v779 = vunpack.c.l.b16 %v152
  %v780 = vunpack.c.h.b16 %v152
  %v781 = vunpack.c.l.b16 %v153
  %v782 = vunpack.c.h.b16 %v153
  %v783 = vunpack.c.l.b16 %v154
  %v784 = vunpack.c.h.b16 %v154
  %v785 = vunpack.c.l.b16 %v155
  %v786 = vunpack.c.h.b16 %v155
  %v787 = vunpack.c.l.b16 %v156
  %v788 = vunpack.c.h.b16 %v156
  %v789 = vunpack.c.l.b16 %v157
  %v790 = vunpack.c.h.b16 %v157
  %v791 = vunpack.c.l.b16 %v158
  %v792 = vunpack.c.h.b16 %v158
  %v793 = vunpack.c.l.b16 %v159
  %v794 = vunpack.c.h.b16 %v159
  %v795 = vunpack.c.l.b16 %v160
  %v796 = vunpack.c.h.b16 %v160
  %v797 = vunpack.c.l.b16 %v161
  %v798 = vunpack.c.h.b16 %v161
  %v799 = vunpack.c.l.b16 %v162
  %v800 = vunpack.c.h.b16 %v162
  %v801 = vunpack.c.l.b16 %v163
  %v802 = vunpack.c.h.b16 %v163
  %v803 = vunpack.c.l.b16 %v164
  %v804 = vunpack.c.h.b16 %v164
  %v805 = vunpack.c.l.b16 %v165
  %v806 = vunpack.c.h.b16 %v165
  %v807 = vunpack.c.l.b16 %v166
  %v808 = vunpack.c.h.b16 %v166
  %v809 = vunpack.c.l.b16 %v167
  %v810 = vunpack.c.h.b16 %v167
  %v811 = vunpack.c.l.b16 %v168
  %v812 = vunpack.c.h.b16 %v168
  %v813 = vunpack.c.l.b16 %v169
  %v814 = vunpack.c.h.b16 %v169
  %v815 = vunpack.c.l.b16 %v170
  %v816 = vunpack.c.h.b16 %v170
  %v817 = vunpack.c.l.b16 %v171
  %v818 = vunpack.c.h.b16 %v171
  %v819 = vunpack.c.l.b16 %v172
  %v820 = vunpack.c.h.b16 %v172
  %v821 = vunpack.c.l.b16 %v173
  %v822 = vunpack.c.h.b16 %v173
  %v823 = vunpack.c.l.b16 %v174
  %v824 = vunpack.c.h.b16 %v174
  %v825 = vunpack.c.l.b16 %v175
  %v826 = vunpack.c.h.b16 %v175
  %v827 = vunpack.c.l.b16 %v176
  %v828 = vunpack.c.h.b16 %v176
  %v829 = vunpack.c.l.b16 %v177
  %v830 = vunpack.c.h.b16 %v177
  %v831 = vunpack.c.l.b16 %v178
  %v832 = vunpack.c.h.b16 %v178
  %v833 = vunpack.c.l.b16 %v179
  %v834 = vunpack.c.h.b16 %v179
  %v835 = vunpack.c.l.b16 %v180
  %v836 = vunpack.c.h.b16 %v180
  %v837 = vunpack.c.l.b16 %v181
  %v838 = vunpack.c.h.b16 %v181
  %v839 = vunpack.c.l.b16 %v182
  %v840 = vunpack.c.h.b16 %v182
  %v841 = vunpack.c.l.b16 %v183
  %v842 = vunpack.c.h.b16 %v183
  %v843 = vunpack.c.l.b16 %v184
  %v844 = vunpack.c.h.b16 %v184
  %v845 = vunpack.c.l.b16 %v185
  %v846 = vunpack.c.h.b16 %v185
  %v847 = vunpack.c.l.b16 %v186
  %v848 = vunpack.c.h.b16 %v186
  %v849 = vunpack.c.l.b16 %v187
  %v850 = vunpack.c.h.b16 %v187
  %v851 = vunpack.c.l.b16 %v188
  %v852 = vunpack.c.h.b16 %v188
  %v853 = vunpack.c.l.b16 %v189
  %v854 = vunpack.c.h.b16 %v189
  %v855 = vunpack.c.l.b16 %v190
  %v856 = vunpack.c.h.b16 %v190
  %v857 = vunpack.c.l.b16 %v191
  %v858 = vunpack.c.h.b16 %v191
  %v859 = vunpack.c.l.b16 %v192
  %v860 = vunpack.c.h.b16 %v192
  %v861 = vunpack.c.l.b16 %v193
  %v862 = vunpack.c.h.b16 %v193
  %v863 = vunpack.c.l.b16 %v194
  %v864 = vunpack.c.h.b16 %v194
  %v865 = vunpack.c.l.b16 %v195
  %v866 = vunpack.c.h.b16 %v195
  %v867 = vunpack.c.l.b16 %v196
  %v868 = vunpack.c.h.b16 %v196
  %v869 = vunpack.c.l.b16 %v197
  %v870 = vunpack.c.h.b16 %v197
  %v871 = vunpack.c.l.b16 %v198
  %v872 = vunpack.c.h.b16 %v198
  %v873 = vunpack.c.l.b16 %v199
  %v874 = vunpack.c.h.b16 %v199
  %v875 = vunpack.c.l.b16 %v200
  %v876 = vunpack.c.h.b16 %v200
  %v877 = vunpack.c.l.b16 %v201
  %v878 = vunpack.c.h.b16 %v201
  %v879 = vunpack.c.l.b16 %v202
  %v880 = vunpack.c.h.b16 %v202
  %v881 = vunpack.c.l.b16 %v203
  %v882 = vunpack.c.h.b16 %v203
  %v883 = vunpack.c.l.b16 %v204
  %v884 = vunpack.c.h.b16 %v204
  %v885 = vunpack.c.l.b16 %v205
  %v886 = vunpack.c.h.b16 %v205
  %v887 = vunpack.c.l.b16 %v206
  %v888 = vunpack.c.h.b16 %v206
  %v889 = vunpack.c.l.b16 %v207
  %v890 = vunpack.c.h.b16 %v207
  %v891 = vunpack.c.l.b16 %v208
  %v892 = vunpack.c.h.b16 %v208
  %v893 = vunpack.c.l.b16 %v209
  %v894 = vunpack.c.h.b16 %v209
  %v895 = vunpack.c.l.b16 %v210
  %v896 = vunpack.c.h.b16 %v210
  %v897 = vunpack.c.l.b16 %v211
  %v898 = vunpack.c.h.b16 %v211
  %v899 = vunpack.c.l.b16 %v212
  %v900 = vunpack.c.h.b16 %v212
  %v901 = vunpack.c.l.b16 %v213
  %v902 = vunpack.c.h.b16 %v213
  %v903 = vunpack.c.l.b16 %v214
  %v904 = vunpack.c.h.b16 %v214
  %v905 = vunpack.c.l.b16 %v215
  %v906 = vunpack.c.h.b16 %v215
  %v907 = vunpack.c.l.b16 %v216
  %v908 = vunpack.c.h.b16 %v216
  %v909 = vunpack.c.l.b16 %v217
  %v910 = vunpack.c.h.b16 %v217
  %v911 = vunpack.c.l.b16 %v218
  %v912 = vunpack.c.h.b16 %v218
  %v913 = vunpack.c.l.b16 %v219
  %v914 = vunpack.c.h.b16 %v219
  %v915 = vunpack.c.l.b16 %v220
  %v916 = vunpack.c.h.b16 %v220
  %v917 = vunpack.c.l.b16 %v221
  %v918 = vunpack.c.h.b16 %v221
  %v919 = vunpack.c.l.b16 %v222
  %v920 = vunpack.c.h.b16 %v222
  %v921 = vunpack.c.l.b16 %v223
  %v922 = vunpack.c.h.b16 %v223
  %v923 = vunpack.c.l.b16 %v224
  %v924 = vunpack.c.h.b16 %v224
  %v925 = vunpack.c.l.b16 %v225
  %v926 = vunpack.c.h.b16 %v225
  %v927 = vunpack.c.l.b16 %v226
  %v928 = vunpack.c.h.b16 %v226
  %v929 = vunpack.c.l.b16 %v227
  %v930 = vunpack.c.h.b16 %v227
  %v931 = vunpack.c.l.b16 %v228
  %v932 = vunpack.c.h.b16 %v228
  %v933 = vunpack.c.l.b16 %v229
  %v934 = vunpack.c.h.b16 %v229
  %v935 = vunpack.c.l.b16 %v230
  %v936 = vunpack.c.h.b16 %v230
  %v937 = vunpack.c.l.b16 %v231
  %v938 = vunpack.c.h.b16 %v231
  %v939 = vunpack.c.l.b16 %v232
  %v940 = vunpack.c.h.b16 %v232
  %v941 = vunpack.c.l.b16 %v233
  %v942 = vunpack.c.h.b16 %v233
  %v943 = vunpack.c.l.b16 %v234
  %v944 = vunpack.c.h.b16 %v234
  %v945 = vunpack.c.l.b16 %v235
  %v946 = vunpack.c.h.b16 %v235
  %v947 = vunpack.c.l.b16 %v236
  %v948 = vunpack.c.h.b16 %v236
  %v949 = vunpack.c.l.b16 %v237
  %v950 = vunpack.c.h.b16 %v237
  %v951 = vunpack.c.l.b16 %v238
  %v952 = vunpack.c.h.b16 %v238
  %v953 = vunpack.c.l.b16 %v239
  %v954 = vunpack.c.h.b16 %v239
  %v955 = vunpack.c.l.b16 %v240
  %v956 = vunpack.c.h.b16 %v240
  %v957 = vunpack.c.l.b16 %v241
  %v958 = vunpack.c.h.b16 %v241
  %v959 = vunpack.c.l.b16 %v242
  %v960 = vunpack.c.h.b16 %v242
  %v961 = vunpack.c.l.b16 %v243
  %v962 = vunpack.c.h.b16 %v243
  %v963 = vunpack.c.l.b16 %v244
  %v964 = vunpack.c.h.b16 %v244
  %v965 = vunpack.c.l.b16 %v245
  %v966 = vunpack.c.h.b16 %v245
  %v967 = vpack.c.b16 %v521, %v519
  %v968 = vpack.c.b16 %v522, %v520
  %v969 = vpack.c.b16 %v525, %v523
  %v970 = vpack.c.b16 %v526, %v524
  %v971 = vpack.c.b16 %v529, %v527
  %v972 = vpack.c.b16 %v530, %v528
  %v973 = vpack.c.b16 %v533, %v531
  %v974 = vpack.c.b16 %v534, %v532
  %v975 = vpack.c.b16 %v537, %v535
  %v976 = vpack.c.b16 %v538, %v536
  %v977 = vpack.c.b16 %v541, %v539
  %v978 = vpack.c.b16 %v542, %v540
  %v979 = vpack.c.b16 %v545, %v543
  %v980 = vpack.c.b16 %v546, %v544
  %v981 = vpack.c.b16 %v549, %v547
  %v982 = vpack.c.b16 %v550, %v548
  %v983 = vpack.c.b16 %v553, %v551
  %v984 = vpack.c.b16 %v554, %v552
  %v985 = vpack.c.b16 %v557, %v555
  %v986 = vpack.c.b16 %v558, %v556
  %v987 = vpack.c.b16 %v561, %v559
  %v988 = vpack.c.b16 %v562, %v560
  %v989 = vpack.c.b16 %v565, %v563
  %v990 = vpack.c.b16 %v566, %v564
  %v991 = vpack.c.b16 %v569, %v567
  %v992 = vpack.c.b16 %v570, %v568
  %v993 = vpack.c.b16 %v573, %v571
  %v994 = vpack.c.b16 %v574, %v572
  %v995 = vpack.c.b16 %v577, %v575
  %v996 = vpack.c.b16 %v578, %v576
  %v997 = vpack.c.b16 %v581, %v579
  %v998 = vpack.c.b16 %v582, %v580
  %v999 = vpack.c.b16 %v585, %v583
  %v1000 = vpack.c.b16 %v586, %v584
  %v1001 = vpack.c.b16 %v589, %v587
  %v1002 = vpack.c.b16 %v590, %v588
  %v1003 = vpack.c.b16 %v593, %v591
  %v1004 = vpack.c.b16 %v594, %v592
  %v1005 = vpack.c.b16 %v597, %v595
  %v1006 = vpack.c.b16 %v598, %v596
  %v1007 = vpack.c.b16 %v601, %v599
  %v1008 = vpack.c.b16 %v602, %v600
  %v1009 = vpack.c.b16 %v605, %v603
  %v1010 = vpack.c.b16 %v606, %v604
  %v1011 = vpack.c.b16 %v609, %v607
  %v1012 = vpack.c.b16 %v610, %v608
  %v1013 = vpack.c.b16 %v613, %v611
  %v1014 = vpack.c.b16 %v614, %v612
  %v1015 = vpack.c.b16 %v617, %v615
  %v1016 = vpack.c.b16 %v618, %v616
  %v1017 = vpack.c.b16 %v621, %v619
  %v1018 = vpack.c.b16 %v622, %v620
  %v1019 = vpack.c.b16 %v625, %v623
  %v1020 = vpack.c.b16 %v626, %v624
  %v1021 = vpack.c.b16 %v629, %v627
  %v1022 = vpack.c.b16 %v630, %v628
  %v1023 = vpack.c.b16 %v633, %v631
  %v1024 = vpack.c.b16 %v634, %v632
  %v1025 = vpack.c.b16 %v637, %v635
  %v1026 = vpack.c.b16 %v638, %v636
  %v1027 = vpack.c.b16 %v641, %v639
  %v1028 = vpack.c.b16 %v642, %v640
  %v1029 = vpack.c.b16 %v645, %v643
  %v1030 = vpack.c.b16 %v646, %v644
  %v1031 = vpack.c.b16 %v649, %v647
  %v1032 = vpack.c.b16 %v650, %v648
  %v1033 = vpack.c.b16 %v653, %v651
  %v1034 = vpack.c.b16 %v654, %v652
  %v1035 = vpack.c.b16 %v657, %v655
  %v1036 = vpack.c.b16 %v658, %v656
  %v1037 = vpack.c.b16 %v661, %v659
  %v1038 = vpack.c.b16 %v662, %v660
  %v1039 = vpack.c.b16 %v665, %v663
  %v1040 = vpack.c.b16 %v666, %v664
  %v1041 = vpack.c.b16 %v669, %v667
  %v1042 = vpack.c.b16 %v670, %v668
  %v1043 = vpack.c.b16 %v673, %v671
  %v1044 = vpack.c.b16 %v674, %v672
  %v1045 = vpack.c.b16 %v677, %v675
  %v1046 = vpack.c.b16 %v678, %v676
  %v1047 = vpack.c.b16 %v681, %v679
  %v1048 = vpack.c.b16 %v682, %v680
  %v1049 = vpack.c.b16 %v685, %v683
  %v1050 = vpack.c.b16 %v686, %v684
  %v1051 = vpack.c.b16 %v689, %v687
  %v1052 = vpack.c.b16 %v690, %v688
  %v1053 = vpack.c.b16 %v693, %v691
  %v1054 = vpack.c.b16 %v694, %v692
  %v1055 = vpack.c.b16 %v697, %v695
  %v1056 = vpack.c.b16 %v698, %v696
  %v1057 = vpack.c.b16 %v701, %v699
  %v1058 = vpack.c.b16 %v702, %v700
  %v1059 = vpack.c.b16 %v705, %v703
  %v1060 = vpack.c.b16 %v706, %v704
  %v1061 = vpack.c.b16 %v709, %v707
  %v1062 = vpack.c.b16 %v710, %v708
  %v1063 = vpack.c.b16 %v713, %v711
  %v1064 = vpack.c.b16 %v714, %v712
  %v1065 = vpack.c.b16 %v717, %v715
  %v1066 = vpack.c.b16 %v718, %v716
  %v1067 = vpack.c.b16 %v721, %v719
  %v1068 = vpack.c.b16 %v722, %v720
  %v1069 = vpack.c.b16 %v725, %v723
  %v1070 = vpack.c.b16 %v726, %v724
  %v1071 = vpack.c.b16 %v729, %v727
  %v1072 = vpack.c.b16 %v730, %v728
  %v1073 = vpack.c.b16 %v733, %v731
  %v1074 = vpack.c.b16 %v734, %v732
  %v1075 = vpack.c.b16 %v737, %v735
  %v1076 = vpack.c.b16 %v738, %v736
  %v1077 = vpack.c.b16 %v741, %v739
  %v1078 = vpack.c.b16 %v742, %v740
  %v1079 = vpack.c.b16 %v745, %v743
  %v1080 = vpack.c.b16 %v746, %v744
  %v1081 = vpack.c.b16 %v749, %v747
  %v1082 = vpack.c.b16 %v750, %v748
  %v1083 = vpack.c.b16 %v753, %v751
  %v1084 = vpack.c.b16 %v754, %v752
  %v1085 = vpack.c.b16 %v757, %v755
  %v1086 = vpack.c.b16 %v758, %v756
  %v1087 = vpack.c.b16 %v761, %v759
  %v1088 = vpack.c.b16 %v762, %v760
  %v1089 = vpack.c.b16 %v765, %v763
  %v1090 = vpack.c.b16 %v766, %v764
  %v1091 = vpack.c.b16 %v769, %v767
  %v1092 = vpack.c.b16 %v770, %v768
  %v1093 = vpack.c.b16 %v773, %v771
  %v1094 = vpack.c.b16 %v774, %v772
  %v1095 = vpack.c.b16 %v777, %v775
  %v1096 = vpack.c.b16 %v778, %v776
  %v1097 = vpack.c.b16 %v781, %v779
  %v1098 = vpack.c.b16 %v782, %v780
  %v1099 = vpack.c.b16 %v785, %v783
  %v1100 = vpack.c.b16 %v786, %v784
  %v1101 = vpack.c.b16 %v789, %v787
  %v1102 = vpack.c.b16 %v790, %v788
  %v1103 = vpack.c.b16 %v793, %v791
  %v1104 = vpack.c.b16 %v794, %v792
  %v1105 = vpack.c.b16 %v797, %v795
  %v1106 = vpack.c.b16 %v798, %v796
  %v1107 = vpack.c.b16 %v801, %v799
  %v1108 = vpack.c.b16 %v802, %v800
  %v1109 = vpack.c.b16 %v805, %v803
  %v1110 = vpack.c.b16 %v806, %v804
  %v1111 = vpack.c.b16 %v809, %v807
  %v1112 = vpack.c.b16 %v810, %v808
  %v1113 = vpack.c.b16 %v813, %v811
  %v1114 = vpack.c.b16 %v814, %v812
  %v1115 = vpack.c.b16 %v817, %v815
  %v1116 = vpack.c.b16 %v818, %v816
  %v1117 = vpack.c.b16 %v821, %v819
  %v1118 = vpack.c.b16 %v822, %v820
  %v1119 = vpack.c.b16 %v825, %v823
  %v1120 = vpack.c.b16 %v826, %v824
  %v1121 = vpack.c.b16 %v829, %v827
  %v1122 = vpack.c.b16 %v830, %v828
  %v1123 = vpack.c.b16 %v833, %v831
  %v1124 = vpack.c.b16 %v834, %v832
  %v1125 = vpack.c.b16 %v837, %v835
  %v1126 = vpack.c.b16 %v838, %v836
  %v1127 = vpack.c.b16 %v841, %v839
  %v1128 = vpack.c.b16 %v842, %v840
  %v1129 = vpack.c.b16 %v845, %v843
  %v1130 = vpack.c.b16 %v846, %v844
  %v1131 = vpack.c.b16 %v849, %v847
  %v1132 = vpack.c.b16 %v850, %v848
  %v1133 = vpack.c.b16 %v853, %v851
  %v1134 = vpack.c.b16 %v854, %v852
  %v1135 = vpack.c.b16 %v857, %v855
  %v1136 = vpack.c.b16 %v858, %v856
  %v1137 = vpack.c.b16 %v861, %v859
  %v1138 = vpack.c.b16 %v862, %v860
  %v1139 = vpack.c.b16 %v865, %v863
  %v1140 = vpack.c.b16 %v866, %v864
  %v1141 = vpack.c.b16 %v869, %v867
  %v1142 = vpack.c.b16 %v870, %v868
  %v1143 = vpack.c.b16 %v873, %v871
  %v1144 = vpack.c.b16 %v874, %v872
  %v1145 = vpack.c.b16 %v877, %v875
  %v1146 = vpack.c.b16 %v878, %v876
  %v1147 = vpack.c.b16 %v881, %v879
  %v1148 = vpack.c.b16 %v882, %v880
  %v1149 = vpack.c.b16 %v885, %v883
  %v1150 = vpack.c.b16 %v886, %v884
  %v1151 = vpack.c.b16 %v889, %v887
  %v1152 = vpack.c.b16 %v890, %v888
  %v1153 = vpack.c.b16 %v893, %v891
  %v1154 = vpack.c.b16 %v894, %v892
  %v1155 = vpack.c.b16 %v897, %v895
  %v1156 = vpack.c.b16 %v898, %v896
  %v1157 = vpack.c.b16 %v901, %v899
  %v1158 = vpack.c.b16 %v902, %v900
  %v1159 = vpack.c.b16 %v905, %v903
  %v1160 = vpack.c.b16 %v906, %v904
  %v1161 = vpack.c.b16 %v909, %v907
  %v1162 = vpack.c.b16 %v910, %v908
  %v1163 = vpack.c.b16 %v913, %v911
  %v1164 = vpack.c.b16 %v914, %v912
  %v1165 = vpack.c.b16 %v917, %v915
  %v1166 = vpack.c.b16 %v918, %v916
  %v1167 = vpack.c.b16 %v921, %v919
  %v1168 = vpack.c.b16 %v922, %v920
  %v1169 = vpack.c.b16 %v925, %v923
  %v1170 = vpack.c.b16 %v926, %v924
  %v1171 = vpack.c.b16 %v929, %v927
  %v1172 = vpack.c.b16 %v930, %v928
  %v1173 = vpack.c.b16 %v933, %v931
  %v1174 = vpack.c.b16 %v934, %v932
  %v1175 = vpack.c.b16 %v937, %v935
  %v1176 = vpack.c.b16 %v938, %v936
  %v1177 = vpack.c.b16 %v941, %v939
  %v1178 = vpack.c.b16 %v942, %v940
  %v1179 = vpack.c.b16 %v945, %v943
  %v1180 = vpack.c.b16 %v946, %v944
  %v1181 = vpack.c.b16 %v949, %v947
  %v1182 = vpack.c.b16 %v950, %v948
  %v1183 = vpack.c.b16 %v953, %v951
  %v1184 = vpack.c.b16 %v954, %v952
  %v1185 = vpack.c.b16 %v957, %v955
  %v1186 = vpack.c.b16 %v958, %v956
  %v1187 = vpack.c.b16 %v961, %v959
  %v1188 = vpack.c.b16 %v962, %v960
  %v1189 = vpack.c.b16 %v965, %v963
  %v1190 = vpack.c.b16 %v966, %v964
  %1415 = vmatprep.subr.bf16.mxu0 %v968
  %1416 = vmatpush1.bf16.msra.mxu0 %v967
  %1417 = vmatprep.subr.bf16.mxu0 %v970
  %1418 = vmatpush1.bf16.msra.mxu0 %v969
  %1419 = vmatprep.subr.bf16.mxu0 %v972
  %1420 = vmatpush1.bf16.msra.mxu0 %v971
  %1421 = vmatprep.subr.bf16.mxu0 %v974
  %1422 = vmatpush1.bf16.msra.mxu0 %v973
  %1423 = vmatprep.subr.bf16.mxu0 %v976
  %1424 = vmatpush1.bf16.msra.mxu0 %v975
  %1425 = vmatprep.subr.bf16.mxu0 %v978
  %1426 = vmatpush1.bf16.msra.mxu0 %v977
  %1427 = vmatprep.subr.bf16.mxu0 %v980
  %1428 = vmatpush1.bf16.msra.mxu0 %v979
  %1429 = vmatprep.subr.bf16.mxu0 %v982
  %1430 = vmatpush1.bf16.msra.mxu0 %v981
  %1431 = vmatprep.subr.bf16.mxu0 %v984
  %1432 = vmatpush1.bf16.msra.mxu0 %v983
  %1433 = vmatprep.subr.bf16.mxu0 %v986
  %1434 = vmatpush1.bf16.msra.mxu0 %v985
  %1435 = vmatprep.subr.bf16.mxu0 %v988
  %1436 = vmatpush1.bf16.msra.mxu0 %v987
  %1437 = vmatprep.subr.bf16.mxu0 %v990
  %1438 = vmatpush1.bf16.msra.mxu0 %v989
  %1439 = vmatprep.subr.bf16.mxu0 %v992
  %1440 = vmatpush1.bf16.msra.mxu0 %v991
  %1441 = vmatprep.subr.bf16.mxu0 %v994
  %1442 = vmatpush1.bf16.msra.mxu0 %v993
  %1443 = vmatprep.subr.bf16.mxu0 %v996
  %1444 = vmatpush1.bf16.msra.mxu0 %v995
  %1445 = vmatprep.subr.bf16.mxu0 %v998
  %1446 = vmatpush1.bf16.msra.mxu0 %v997
  %1447 = vmatprep.mubr.bf16.mxu0 %v268
  %1448 = vmatmul.mubr.bf16.gmra.mrb[0].mxu0 %v267
  %v1449 = vpop.f32.mrb[0].mxu0
  %v1450 = vadd.f32 0.0, %v1449
  %v1451 = vpop.f32.mrb[0].mxu0
  %v1452 = vadd.f32 0.0, %v1451
  %v1453 = vpop.f32.mrb[0].mxu0
  %v1454 = vpop.f32.mrb[0].mxu0
  %1455 = vdwg.mxu0
  %1456 = vmatprep.subr.bf16.mxu0 %v1000
  %1457 = vmatpush1.bf16.msra.mxu0 %v999
  %1458 = vmatprep.subr.bf16.mxu0 %v1002
  %1459 = vmatpush1.bf16.msra.mxu0 %v1001
  %1460 = vmatprep.subr.bf16.mxu0 %v1004
  %1461 = vmatpush1.bf16.msra.mxu0 %v1003
  %1462 = vmatprep.subr.bf16.mxu0 %v1006
  %1463 = vmatpush1.bf16.msra.mxu0 %v1005
  %1464 = vmatprep.subr.bf16.mxu0 %v1008
  %1465 = vmatpush1.bf16.msra.mxu0 %v1007
  %1466 = vmatprep.subr.bf16.mxu0 %v1010
  %1467 = vmatpush1.bf16.msra.mxu0 %v1009
  %1468 = vmatprep.subr.bf16.mxu0 %v1012
  %1469 = vmatpush1.bf16.msra.mxu0 %v1011
  %1470 = vmatprep.subr.bf16.mxu0 %v1014
  %1471 = vmatpush1.bf16.msra.mxu0 %v1013
  %1472 = vmatprep.subr.bf16.mxu0 %v1016
  %1473 = vmatpush1.bf16.msra.mxu0 %v1015
  %1474 = vmatprep.subr.bf16.mxu0 %v1018
  %1475 = vmatpush1.bf16.msra.mxu0 %v1017
  %1476 = vmatprep.subr.bf16.mxu0 %v1020
  %1477 = vmatpush1.bf16.msra.mxu0 %v1019
  %1478 = vmatprep.subr.bf16.mxu0 %v1022
  %1479 = vmatpush1.bf16.msra.mxu0 %v1021
  %1480 = vmatprep.subr.bf16.mxu0 %v1024
  %1481 = vmatpush1.bf16.msra.mxu0 %v1023
  %1482 = vmatprep.subr.bf16.mxu0 %v1026
  %1483 = vmatpush1.bf16.msra.mxu0 %v1025
  %1484 = vmatprep.subr.bf16.mxu0 %v1028
  %1485 = vmatpush1.bf16.msra.mxu0 %v1027
  %1486 = vmatprep.subr.bf16.mxu0 %v1030
  %1487 = vmatpush1.bf16.msra.mxu0 %v1029
  %1488 = vmatprep.mubr.bf16.mxu0 %v270
  %1489 = vmatmul.mubr.bf16.gmra.mrb[0].mxu0 %v269
  %v1490 = vpop.f32.mrb[0].mxu0
  %v1491 = vadd.f32 %v1450, %v1490
  %v1492 = vpop.f32.mrb[0].mxu0
  %v1493 = vadd.f32 %v1452, %v1492
  %v1494 = vpop.f32.mrb[0].mxu0
  %v1495 = vpop.f32.mrb[0].mxu0
  %1496 = vdwg.mxu0
  %1497 = vmatprep.subr.bf16.mxu0 %v1032
  %1498 = vmatpush1.bf16.msra.mxu0 %v1031
  %1499 = vmatprep.subr.bf16.mxu0 %v1034
  %1500 = vmatpush1.bf16.msra.mxu0 %v1033
  %1501 = vmatprep.subr.bf16.mxu0 %v1036
  %1502 = vmatpush1.bf16.msra.mxu0 %v1035
  %1503 = vmatprep.subr.bf16.mxu0 %v1038
  %1504 = vmatpush1.bf16.msra.mxu0 %v1037
  %1505 = vmatprep.subr.bf16.mxu0 %v1040
  %1506 = vmatpush1.bf16.msra.mxu0 %v1039
  %1507 = vmatprep.subr.bf16.mxu0 %v1042
  %1508 = vmatpush1.bf16.msra.mxu0 %v1041
  %1509 = vmatprep.subr.bf16.mxu0 %v1044
  %1510 = vmatpush1.bf16.msra.mxu0 %v1043
  %1511 = vmatprep.subr.bf16.mxu0 %v1046
  %1512 = vmatpush1.bf16.msra.mxu0 %v1045
  %1513 = vmatprep.subr.bf16.mxu0 %v1048
  %1514 = vmatpush1.bf16.msra.mxu0 %v1047
  %1515 = vmatprep.subr.bf16.mxu0 %v1050
  %1516 = vmatpush1.bf16.msra.mxu0 %v1049
  %1517 = vmatprep.subr.bf16.mxu0 %v1052
  %1518 = vmatpush1.bf16.msra.mxu0 %v1051
  %1519 = vmatprep.subr.bf16.mxu0 %v1054
  %1520 = vmatpush1.bf16.msra.mxu0 %v1053
  %1521 = vmatprep.subr.bf16.mxu0 %v1056
  %1522 = vmatpush1.bf16.msra.mxu0 %v1055
  %1523 = vmatprep.subr.bf16.mxu0 %v1058
  %1524 = vmatpush1.bf16.msra.mxu0 %v1057
  %1525 = vmatprep.subr.bf16.mxu0 %v1060
  %1526 = vmatpush1.bf16.msra.mxu0 %v1059
  %1527 = vmatprep.subr.bf16.mxu0 %v1062
  %1528 = vmatpush1.bf16.msra.mxu0 %v1061
  %1529 = vmatprep.mubr.bf16.mxu0 %v272
  %1530 = vmatmul.mubr.bf16.gmra.mrb[0].mxu0 %v271
  %v1531 = vpop.f32.mrb[0].mxu0
  %v1532 = vadd.f32 %v1491, %v1531
  %v1533 = vpop.f32.mrb[0].mxu0
  %v1534 = vadd.f32 %v1493, %v1533
  %v1535 = vpop.f32.mrb[0].mxu0
  %v1536 = vpop.f32.mrb[0].mxu0
  %1537 = vdwg.mxu0
  %1538 = vmatprep.subr.bf16.mxu0 %v1064
  %1539 = vmatpush1.bf16.msra.mxu0 %v1063
  %1540 = vmatprep.subr.bf16.mxu0 %v1066
  %1541 = vmatpush1.bf16.msra.mxu0 %v1065
  %1542 = vmatprep.subr.bf16.mxu0 %v1068
  %1543 = vmatpush1.bf16.msra.mxu0 %v1067
  %1544 = vmatprep.subr.bf16.mxu0 %v1070
  %1545 = vmatpush1.bf16.msra.mxu0 %v1069
  %1546 = vmatprep.subr.bf16.mxu0 %v1072
  %1547 = vmatpush1.bf16.msra.mxu0 %v1071
  %1548 = vmatprep.subr.bf16.mxu0 %v1074
  %1549 = vmatpush1.bf16.msra.mxu0 %v1073
  %1550 = vmatprep.subr.bf16.mxu0 %v1076
  %1551 = vmatpush1.bf16.msra.mxu0 %v1075
  %1552 = vmatprep.subr.bf16.mxu0 %v1078
  %1553 = vmatpush1.bf16.msra.mxu0 %v1077
  %1554 = vmatprep.subr.bf16.mxu0 %v1080
  %1555 = vmatpush1.bf16.msra.mxu0 %v1079
  %1556 = vmatprep.subr.bf16.mxu0 %v1082
  %1557 = vmatpush1.bf16.msra.mxu0 %v1081
  %1558 = vmatprep.subr.bf16.mxu0 %v1084
  %1559 = vmatpush1.bf16.msra.mxu0 %v1083
  %1560 = vmatprep.subr.bf16.mxu0 %v1086
  %1561 = vmatpush1.bf16.msra.mxu0 %v1085
  %1562 = vmatprep.subr.bf16.mxu0 %v1088
  %1563 = vmatpush1.bf16.msra.mxu0 %v1087
  %1564 = vmatprep.subr.bf16.mxu0 %v1090
  %1565 = vmatpush1.bf16.msra.mxu0 %v1089
  %1566 = vmatprep.subr.bf16.mxu0 %v1092
  %1567 = vmatpush1.bf16.msra.mxu0 %v1091
  %1568 = vmatprep.subr.bf16.mxu0 %v1094
  %1569 = vmatpush1.bf16.msra.mxu0 %v1093
  %1570 = vmatprep.mubr.bf16.mxu0 %v274
  %1571 = vmatmul.mubr.bf16.gmra.mrb[0].mxu0 %v273
  %v1572 = vpop.f32.mrb[0].mxu0
  %v1573 = vadd.f32 %v1532, %v1572
  %v1574 = vpop.f32.mrb[0].mxu0
  %v1575 = vadd.f32 %v1534, %v1574
  %v1576 = vpop.f32.mrb[0].mxu0
  %v1577 = vpop.f32.mrb[0].mxu0
  %1578 = vdwg.mxu0
  %1579 = vmatprep.subr.bf16.mxu0 %v1096
  %1580 = vmatpush1.bf16.msra.mxu0 %v1095
  %1581 = vmatprep.subr.bf16.mxu0 %v1098
  %1582 = vmatpush1.bf16.msra.mxu0 %v1097
  %1583 = vmatprep.subr.bf16.mxu0 %v1100
  %1584 = vmatpush1.bf16.msra.mxu0 %v1099
  %1585 = vmatprep.subr.bf16.mxu0 %v1102
  %1586 = vmatpush1.bf16.msra.mxu0 %v1101
  %1587 = vmatprep.subr.bf16.mxu0 %v1104
  %1588 = vmatpush1.bf16.msra.mxu0 %v1103
  %1589 = vmatprep.subr.bf16.mxu0 %v1106
  %1590 = vmatpush1.bf16.msra.mxu0 %v1105
  %1591 = vmatprep.subr.bf16.mxu0 %v1108
  %1592 = vmatpush1.bf16.msra.mxu0 %v1107
  %1593 = vmatprep.subr.bf16.mxu0 %v1110
  %1594 = vmatpush1.bf16.msra.mxu0 %v1109
  %1595 = vmatprep.subr.bf16.mxu0 %v1112
  %1596 = vmatpush1.bf16.msra.mxu0 %v1111
  %1597 = vmatprep.subr.bf16.mxu0 %v1114
  %1598 = vmatpush1.bf16.msra.mxu0 %v1113
  %1599 = vmatprep.subr.bf16.mxu0 %v1116
  %1600 = vmatpush1.bf16.msra.mxu0 %v1115
  %1601 = vmatprep.subr.bf16.mxu0 %v1118
  %1602 = vmatpush1.bf16.msra.mxu0 %v1117
  %1603 = vmatprep.subr.bf16.mxu0 %v1120
  %1604 = vmatpush1.bf16.msra.mxu0 %v1119
  %1605 = vmatprep.subr.bf16.mxu0 %v1122
  %1606 = vmatpush1.bf16.msra.mxu0 %v1121
  %1607 = vmatprep.subr.bf16.mxu0 %v1124
  %1608 = vmatpush1.bf16.msra.mxu0 %v1123
  %1609 = vmatprep.subr.bf16.mxu0 %v1126
  %1610 = vmatpush1.bf16.msra.mxu0 %v1125
  %1611 = vmatprep.mubr.bf16.mxu0 %v276
  %1612 = vmatmul.mubr.bf16.gmra.mrb[0].mxu0 %v275
  %v1613 = vpop.f32.mrb[0].mxu0
  %v1614 = vadd.f32 %v1573, %v1613
  %v1615 = vpop.f32.mrb[0].mxu0
  %v1616 = vadd.f32 %v1575, %v1615
  %v1617 = vpop.f32.mrb[0].mxu0
  %v1618 = vpop.f32.mrb[0].mxu0
  %1619 = vdwg.mxu0
  %1620 = vmatprep.subr.bf16.mxu0 %v1128
  %1621 = vmatpush1.bf16.msra.mxu0 %v1127
  %1622 = vmatprep.subr.bf16.mxu0 %v1130
  %1623 = vmatpush1.bf16.msra.mxu0 %v1129
  %1624 = vmatprep.subr.bf16.mxu0 %v1132
  %1625 = vmatpush1.bf16.msra.mxu0 %v1131
  %1626 = vmatprep.subr.bf16.mxu0 %v1134
  %1627 = vmatpush1.bf16.msra.mxu0 %v1133
  %1628 = vmatprep.subr.bf16.mxu0 %v1136
  %1629 = vmatpush1.bf16.msra.mxu0 %v1135
  %1630 = vmatprep.subr.bf16.mxu0 %v1138
  %1631 = vmatpush1.bf16.msra.mxu0 %v1137
  %1632 = vmatprep.subr.bf16.mxu0 %v1140
  %1633 = vmatpush1.bf16.msra.mxu0 %v1139
  %1634 = vmatprep.subr.bf16.mxu0 %v1142
  %1635 = vmatpush1.bf16.msra.mxu0 %v1141
  %1636 = vmatprep.subr.bf16.mxu0 %v1144
  %1637 = vmatpush1.bf16.msra.mxu0 %v1143
  %1638 = vmatprep.subr.bf16.mxu0 %v1146
  %1639 = vmatpush1.bf16.msra.mxu0 %v1145
  %1640 = vmatprep.subr.bf16.mxu0 %v1148
  %1641 = vmatpush1.bf16.msra.mxu0 %v1147
  %1642 = vmatprep.subr.bf16.mxu0 %v1150
  %1643 = vmatpush1.bf16.msra.mxu0 %v1149
  %1644 = vmatprep.subr.bf16.mxu0 %v1152
  %1645 = vmatpush1.bf16.msra.mxu0 %v1151
  %1646 = vmatprep.subr.bf16.mxu0 %v1154
  %1647 = vmatpush1.bf16.msra.mxu0 %v1153
  %1648 = vmatprep.subr.bf16.mxu0 %v1156
  %1649 = vmatpush1.bf16.msra.mxu0 %v1155
  %1650 = vmatprep.subr.bf16.mxu0 %v1158
  %1651 = vmatpush1.bf16.msra.mxu0 %v1157
  %1652 = vmatprep.mubr.bf16.mxu0 %v278
  %1653 = vmatmul.mubr.bf16.gmra.mrb[0].mxu0 %v277
  %v1654 = vpop.f32.mrb[0].mxu0
  %v1655 = vadd.f32 %v1614, %v1654
  %v1656 = vpop.f32.mrb[0].mxu0
  %v1657 = vadd.f32 %v1616, %v1656
  %v1658 = vpop.f32.mrb[0].mxu0
  %v1659 = vpop.f32.mrb[0].mxu0
  %1660 = vdwg.mxu0
  %1661 = vmatprep.subr.bf16.mxu0 %v1160
  %1662 = vmatpush1.bf16.msra.mxu0 %v1159
  %1663 = vmatprep.subr.bf16.mxu0 %v1162
  %1664 = vmatpush1.bf16.msra.mxu0 %v1161
  %1665 = vmatprep.subr.bf16.mxu0 %v1164
  %1666 = vmatpush1.bf16.msra.mxu0 %v1163
  %1667 = vmatprep.subr.bf16.mxu0 %v1166
  %1668 = vmatpush1.bf16.msra.mxu0 %v1165
  %1669 = vmatprep.subr.bf16.mxu0 %v1168
  %1670 = vmatpush1.bf16.msra.mxu0 %v1167
  %1671 = vmatprep.subr.bf16.mxu0 %v1170
  %1672 = vmatpush1.bf16.msra.mxu0 %v1169
  %1673 = vmatprep.subr.bf16.mxu0 %v1172
  %1674 = vmatpush1.bf16.msra.mxu0 %v1171
  %1675 = vmatprep.subr.bf16.mxu0 %v1174
  %1676 = vmatpush1.bf16.msra.mxu0 %v1173
  %1677 = vmatprep.subr.bf16.mxu0 %v1176
  %1678 = vmatpush1.bf16.msra.mxu0 %v1175
  %1679 = vmatprep.subr.bf16.mxu0 %v1178
  %1680 = vmatpush1.bf16.msra.mxu0 %v1177
  %1681 = vmatprep.subr.bf16.mxu0 %v1180
  %1682 = vmatpush1.bf16.msra.mxu0 %v1179
  %1683 = vmatprep.subr.bf16.mxu0 %v1182
  %1684 = vmatpush1.bf16.msra.mxu0 %v1181
  %1685 = vmatprep.subr.bf16.mxu0 %v1184
  %1686 = vmatpush1.bf16.msra.mxu0 %v1183
  %1687 = vmatprep.subr.bf16.mxu0 %v1186
  %1688 = vmatpush1.bf16.msra.mxu0 %v1185
  %1689 = vmatprep.subr.bf16.mxu0 %v1188
  %1690 = vmatpush1.bf16.msra.mxu0 %v1187
  %1691 = vmatprep.subr.bf16.mxu0 %v1190
  %1692 = vmatpush1.bf16.msra.mxu0 %v1189
  %1693 = vmatprep.mubr.bf16.mxu0 %v280
  %1694 = vmatmul.mubr.bf16.gmra.mrb[0].mxu0 %v279
  %v1695 = vpop.f32.mrb[0].mxu0
  %v1696 = vadd.f32 %v1655, %v1695
  %v1697 = vpop.f32.mrb[0].mxu0
  %v1698 = vadd.f32 %v1657, %v1697
  %v1699 = vpop.f32.mrb[0].mxu0
  %v1700 = vpop.f32.mrb[0].mxu0
  %1701 = vdwg.mxu0
  %v1702 = vmax.f32 %v1696, 0.0
  %v1703 = vmax.f32 %v1698, 0.0
  %v1704 = vpack.c.bf16 %v1702, %v1702
  %v1705 = vpack.c.bf16 %v1703, %v1703
  %v1706 = vld [vmem:[%s2] sm:$0xf]
  %v1707 = vld [vmem:[%s2 + $0x4] sm:$0xf]
  %v1708 = vld [vmem:[%s2 + $0x8] sm:$0xf]
  %v1709 = vld [vmem:[%s2 + $0xc] sm:$0xf]
  %v1710 = vld [vmem:[%s2 + $0x10] sm:$0xf]
  %v1711 = vld [vmem:[%s2 + $0x14] sm:$0xf]
  %v1712 = vld [vmem:[%s2 + $0x18] sm:$0xf]
  %v1713 = vld [vmem:[%s2 + $0x1c] sm:$0xf]
  %v1714 = vld [vmem:[%s2 + $0x20] sm:$0xf]
  %v1715 = vld [vmem:[%s2 + $0x24] sm:$0xf]
  %v1716 = vld [vmem:[%s2 + $0x28] sm:$0xf]
  %v1717 = vld [vmem:[%s2 + $0x2c] sm:$0xf]
  %v1718 = vld [vmem:[%s2 + $0x30] sm:$0xf]
  %v1719 = vld [vmem:[%s2 + $0x34] sm:$0xf]
  %v1720 = vld [vmem:[%s2 + $0x38] sm:$0xf]
  %v1721 = vld [vmem:[%s2 + $0x3c] sm:$0xf]
  %v1722 = vld [vmem:[%s2 + $0x40] sm:$0xf]
  %v1723 = vld [vmem:[%s2 + $0x44] sm:$0xf]
  %v1724 = vld [vmem:[%s2 + $0x48] sm:$0xf]
  %v1725 = vld [vmem:[%s2 + $0x4c] sm:$0xf]
  %v1726 = vld [vmem:[%s2 + $0x50] sm:$0xf]
  %v1727 = vld [vmem:[%s2 + $0x54] sm:$0xf]
  %v1728 = vld [vmem:[%s2 + $0x58] sm:$0xf]
  %v1729 = vld [vmem:[%s2 + $0x5c] sm:$0xf]
  %v1730 = vld [vmem:[%s2 + $0x60] sm:$0xf]
  %v1731 = vld [vmem:[%s2 + $0x64] sm:$0xf]
  %v1732 = vld [vmem:[%s2 + $0x68] sm:$0xf]
  %v1733 = vld [vmem:[%s2 + $0x6c] sm:$0xf]
  %v1734 = vld [vmem:[%s2 + $0x70] sm:$0xf]
  %v1735 = vld [vmem:[%s2 + $0x74] sm:$0xf]
  %v1736 = vld [vmem:[%s2 + $0x78] sm:$0xf]
  %v1737 = vld [vmem:[%s2 + $0x7c] sm:$0xf]
  %v1770 = vunpack.c.l.b16 %v1706
  %v1771 = vunpack.c.l.b16 %v1707
  %v1772 = vunpack.c.l.b16 %v1708
  %v1773 = vunpack.c.l.b16 %v1709
  %v1774 = vunpack.c.l.b16 %v1710
  %v1775 = vunpack.c.l.b16 %v1711
  %v1776 = vunpack.c.l.b16 %v1712
  %v1777 = vunpack.c.l.b16 %v1713
  %v1778 = vunpack.c.l.b16 %v1714
  %v1779 = vunpack.c.l.b16 %v1715
  %v1780 = vunpack.c.l.b16 %v1716
  %v1781 = vunpack.c.l.b16 %v1717
  %v1782 = vunpack.c.l.b16 %v1718
  %v1783 = vunpack.c.l.b16 %v1719
  %v1784 = vunpack.c.l.b16 %v1720
  %v1785 = vunpack.c.l.b16 %v1721
  %v1786 = vunpack.c.l.b16 %v1722
  %v1787 = vunpack.c.l.b16 %v1723
  %v1788 = vunpack.c.l.b16 %v1724
  %v1789 = vunpack.c.l.b16 %v1725
  %v1790 = vunpack.c.l.b16 %v1726
  %v1791 = vunpack.c.l.b16 %v1727
  %v1792 = vunpack.c.l.b16 %v1728
  %v1793 = vunpack.c.l.b16 %v1729
  %v1794 = vunpack.c.l.b16 %v1730
  %v1795 = vunpack.c.l.b16 %v1731
  %v1796 = vunpack.c.l.b16 %v1732
  %v1797 = vunpack.c.l.b16 %v1733
  %v1798 = vunpack.c.l.b16 %v1734
  %v1799 = vunpack.c.l.b16 %v1735
  %v1800 = vunpack.c.l.b16 %v1736
  %v1801 = vunpack.c.l.b16 %v1737
  %v1802 = vpack.c.b16 %v1771, %v1770
  %v1803 = vpack.c.b16 %v1773, %v1772
  %v1804 = vpack.c.b16 %v1775, %v1774
  %v1805 = vpack.c.b16 %v1777, %v1776
  %v1806 = vpack.c.b16 %v1779, %v1778
  %v1807 = vpack.c.b16 %v1781, %v1780
  %v1808 = vpack.c.b16 %v1783, %v1782
  %v1809 = vpack.c.b16 %v1785, %v1784
  %v1810 = vpack.c.b16 %v1787, %v1786
  %v1811 = vpack.c.b16 %v1789, %v1788
  %v1812 = vpack.c.b16 %v1791, %v1790
  %v1813 = vpack.c.b16 %v1793, %v1792
  %v1814 = vpack.c.b16 %v1795, %v1794
  %v1815 = vpack.c.b16 %v1797, %v1796
  %v1816 = vpack.c.b16 %v1799, %v1798
  %v1817 = vpack.c.b16 %v1801, %v1800
  %1834 = vmatprep.subr.bf16.mxu0 0
  %1835 = vmatpush1.bf16.msra.mxu0 %v1802
  %1836 = vmatprep.subr.bf16.mxu0 0
  %1837 = vmatpush1.bf16.msra.mxu0 %v1803
  %1838 = vmatprep.subr.bf16.mxu0 0
  %1839 = vmatpush1.bf16.msra.mxu0 %v1804
  %1840 = vmatprep.subr.bf16.mxu0 0
  %1841 = vmatpush1.bf16.msra.mxu0 %v1805
  %1842 = vmatprep.subr.bf16.mxu0 0
  %1843 = vmatpush1.bf16.msra.mxu0 %v1806
  %1844 = vmatprep.subr.bf16.mxu0 0
  %1845 = vmatpush1.bf16.msra.mxu0 %v1807
  %1846 = vmatprep.subr.bf16.mxu0 0
  %1847 = vmatpush1.bf16.msra.mxu0 %v1808
  %1848 = vmatprep.subr.bf16.mxu0 0
  %1849 = vmatpush1.bf16.msra.mxu0 %v1809
  %1850 = vmatprep.subr.bf16.mxu0 0
  %1851 = vmatpush1.bf16.msra.mxu0 %v1810
  %1852 = vmatprep.subr.bf16.mxu0 0
  %1853 = vmatpush1.bf16.msra.mxu0 %v1811
  %1854 = vmatprep.subr.bf16.mxu0 0
  %1855 = vmatpush1.bf16.msra.mxu0 %v1812
  %1856 = vmatprep.subr.bf16.mxu0 0
  %1857 = vmatpush1.bf16.msra.mxu0 %v1813
  %1858 = vmatprep.subr.bf16.mxu0 0
  %1859 = vmatpush1.bf16.msra.mxu0 %v1814
  %1860 = vmatprep.subr.bf16.mxu0 0
  %1861 = vmatpush1.bf16.msra.mxu0 %v1815
  %1862 = vmatprep.subr.bf16.mxu0 0
  %1863 = vmatpush1.bf16.msra.mxu0 %v1816
  %1864 = vmatprep.subr.bf16.mxu0 0
  %1865 = vmatpush1.bf16.msra.mxu0 %v1817
  %1866 = vmatprep.mubr.bf16.mxu0 %v1705
  %1867 = vmatmul.mubr.bf16.gmra.mrb[0].mxu0 %v1704
  %v1868 = vpop.f32.mrb[0].mxu0
  %v1869 = vadd.f32 0.0, %v1868
  %v1870 = vpop.f32.mrb[0].mxu0
  %v1871 = vpop.f32.mrb[0].mxu0
  %v1872 = vpop.f32.mrb[0].mxu0
  %1873 = vdwg.mxu0
  %1874 = vst [vmem:[%s3] sm:$0xff] %v1869
  // Predicated region
  $region14: #{net_forward.1} parent=0 // pred_check
    _
  $region15: #{net_forward.1} parent=0 // pred_check_branch
    %1876 = sbr.rel (0) target = $region17
  $region16: #{net_forward.1} parent=0 // pred_region
    _
  $region17: #{net_forward.1} parent=0 // pred_fallthru
    _
  // Predicated region
  $region18: #{net_forward.1} parent=0 // pred_check
    _
  $region19: #{net_forward.1} parent=0 // pred_check_branch
    %1878 = sbr.rel (0) target = $region21
  $region20: #{net_forward.1} parent=0 // pred_region
    _
  $region21: #{net_forward.1} parent=0 // pred_fallthru
    _

</llo_original>
